<compile_context>
chip_gen: v5e
topology: v5e:2x2
jax: 0.10.0
libtpu: 0.0.40
codegen_flags: <defaults>
</compile_context>

<pallas_src>
from collections import namedtuple

import jax
import jax.numpy as jnp
from jax.experimental import pallas as pl
from jax.experimental.pallas import tpu as pltpu

# ----------------------------- config ---------------------------------------
QFuncCfg = namedtuple("QFuncCfg", ["POS_DIM", "POS_NUM", "SEG_NUM",
                                   "USE_RELATIVE_EMBEDDING"])
Config = namedtuple("Config", ["q_func"])

CONFIG = Config(q_func=QFuncCfg(POS_DIM=16, POS_NUM=256, SEG_NUM=10,
                                USE_RELATIVE_EMBEDDING=True))
HIDDEN_SIZE = 64          # module default is 50; 64 so bidirectional -> 128 lanes
BIDIRECTIONAL = True
H = HIDDEN_SIZE * 2 if BIDIRECTIONAL else HIDDEN_SIZE   # 128
P = CONFIG.q_func.POS_DIM                               # 16
SEG = CONFIG.q_func.SEG_NUM                             # 10

MIN_LANE_TILE = 128       # hardware lane width
MAX_LANE_TILE = 512       # ~85% of HBM roofline per measured tiling data


def _round_up(x, m):
    return ((x + m - 1) // m) * m


def _choose_tiling(L):
    """Pick (padded_B, lane_tile) at trace time.

    Guarantees: tile is a multiple of 128, tile <= 512, tile divides B, and the
    grid has >= 2 steps whenever L > 128 (keeps both v7x TensorCores busy)."""
    if L <= MIN_LANE_TILE:
        return MIN_LANE_TILE, MIN_LANE_TILE
    if L <= 2 * MAX_LANE_TILE:
        B = _round_up(L, 2 * MIN_LANE_TILE)      # multiple of 256
        return B, B // 2                          # exactly 2 grid steps
    B = _round_up(L, MAX_LANE_TILE)               # multiple of 512
    return B, MAX_LANE_TILE                       # >= 3 grid steps


# ----------------------------- kernel ---------------------------------------
def q_i_j_kernel(cs_ref, wrt_ref, ht_ref, st_ref, pb_ref, o_ref):
    """cs: (H,1) f32   wrt: (H,H) bf16 (= w_redundancy^T)
       ht, st: (H, TB) bf16 (h^T, sum_i^T)   pb, o: (1, TB) f32."""
    ht_bf = ht_ref[...]                                   # (H, TB) bf16
    ht = ht_bf.astype(jnp.float32)                        # f32 for VPU math
    t = jnp.tanh(st_ref[...].astype(jnp.float32))         # f32 tanh (v5e-safe)

    # redundancy bilinear, computed transposed on the MXU (bf16, f32 acc):
    #   (Wr^T @ h^T)                                      -> (H, TB)
    hwr_t = jnp.dot(wrt_ref[...], ht_bf,
                    preferred_element_type=jnp.float32)

    # content + salience - redundancy in one fused VPU FMA + XLU sublane reduce:
    #   sum_k( cs[k]*h[k]  -  (Wr^T h)[k] * tanh(s)[k] )   -> (1, TB)
    o_ref[...] = (jnp.sum(cs_ref[...] * ht - hwr_t * t, axis=0, keepdims=True)
                  + pb_ref[...])


def _q_pallas(cs_col, wrt, ht, st, pb, tile):
    Hd, B = ht.shape
    nb = B // tile
    return pl.pallas_call(
        q_i_j_kernel,
        out_shape=jax.ShapeDtypeStruct((1, B), jnp.float32),
        grid_spec=pltpu.PrefetchScalarGridSpec(
            num_scalar_prefetch=0,
            grid=(nb,),
            in_specs=[
                pl.BlockSpec((Hd, 1), lambda i: (0, 0)),       # cs column (resident)
                pl.BlockSpec((Hd, Hd), lambda i: (0, 0)),      # Wr^T (resident)
                pl.BlockSpec((Hd, tile), lambda i: (0, i)),    # h^T tile (bf16)
                pl.BlockSpec((Hd, tile), lambda i: (0, i)),    # sum^T tile (bf16)
                pl.BlockSpec((1, tile), lambda i: (0, i)),     # pos+bias tile
            ],
            out_specs=pl.BlockSpec((1, tile), lambda i: (0, i)),
        ),
        compiler_params=pltpu.CompilerParams(
            dimension_semantics=("parallel",)),
    )(cs_col, wrt, ht, st, pb)


# ----------------------------- params ---------------------------------------
def init_params(key):
    ks = jax.random.split(key, 8)
    u = lambda k, shape, a=0.1: jax.random.uniform(k, shape, jnp.float32, -a, a)
    params = dict(
        w_content=u(ks[0], (1, H)),                                # nn.Linear(H, 1)
        w_salience=u(ks[1], (H, H)),                               # nn.Bilinear weight[0]
        w_redundancy=u(ks[2], (H, H)),                             # nn.Bilinear weight[0]
        bias=u(ks[3], (1, 1)),                                     # nn.Parameter (1,)
        w_abs=u(ks[4], (1, P)),                                    # nn.Linear(P, 1)
        abs_pos_embed=u(ks[5], (CONFIG.q_func.POS_NUM, P), 1.0),   # nn.Embedding
        rel_pos_embed=u(ks[6], (SEG, P), 1.0),                     # nn.Embedding
        w_rel=u(ks[7], (1, P)),                                    # nn.Linear(P, 1)
    )
    # bf16 transposed redundancy weight, cast ONCE at init. (The weight is a
    # resident 32 KiB tile so this is not a bandwidth win; it simply keeps the
    # MXU on the native bf16 path matching the bf16 streamed activations.)
    params["w_redundancy_t_bf16"] = params["w_redundancy"].T.astype(jnp.bfloat16)
    return params


# ----------------------------- forward (whole document) ----------------------
@jax.jit
def q_i_j_forward_doc(params, h_all, D_i, sum_all):
    """h_all, sum_all: (L, H) f32; D_i: (1, H) f32.
    Returns (L, 1): row i == original module forward(h_all[i], i, L, D_i, sum_all[i])."""
    L, _ = h_all.shape
    B, tile = _choose_tiling(L)

    # --- document-level hoist: content + salience collapse onto one (H, 1) col
    #     h . w_content + h . (Ws @ D_i^T)  ==  h . cs
    cs_col = (params["w_content"] + D_i @ params["w_salience"].T).T     # (H, 1)

    # --- positional terms + bias (tiny 16-d dots, fused by XLA with gathers)
    idx = jnp.arange(L)
    abs_p = params["abs_pos_embed"][idx] @ params["w_abs"].T            # (L, 1)
    if CONFIG.q_func.USE_RELATIVE_EMBEDDING:
        rel_id = jnp.clip(
            jnp.round((idx + 1) * (SEG - 1.0) / L).astype(jnp.int32), 0, SEG - 1)
        rel_p = params["rel_pos_embed"][rel_id] @ params["w_rel"].T     # (L, 1)
    else:
        rel_p = jnp.zeros((L, 1), jnp.float32)
    pos_bias = (abs_p + rel_p + params["bias"]).reshape(1, L)           # (1, L)

    # --- pad sentence axis to the lane-tile multiple, put it on lanes, and
    #     cast the streamed operands to bf16 inside the same fused copy.
    pad = B - L
    ht = jnp.pad(h_all, ((0, pad), (0, 0))).T.astype(jnp.bfloat16)      # (H, B)
    st = jnp.pad(sum_all, ((0, pad), (0, 0))).T.astype(jnp.bfloat16)    # (H, B)
    pb = jnp.pad(pos_bias, ((0, 0), (0, pad)))                          # (1, B)

    q = _q_pallas(cs_col, params["w_redundancy_t_bf16"], ht, st, pb, tile)
    return q[0, :L].reshape(L, 1)


# ----------------------------- references (pure JAX, f32) --------------------
def q_i_j_reference(params, h, h_idx, doc_len, D_i, sum_i):
    """Per-sentence reference mirroring the torch module's forward."""
    content = h @ params["w_content"].T
    salience = (h @ params["w_salience"]) @ D_i.T
    redundancy = -((h @ params["w_redundancy"]) @ jnp.tanh(sum_i).T)
    abs_feat = params["abs_pos_embed"][h_idx][None, :]
    abs_p = abs_feat @ params["w_abs"].T
    q = content + salience + redundancy + abs_p + params["bias"]
    if CONFIG.q_func.USE_RELATIVE_EMBEDDING:
        h_rel_id = int(round((h_idx + 1) * (SEG - 1.0) / doc_len))
        rel_feat = params["rel_pos_embed"][h_rel_id][None, :]
        q = q + rel_feat @ params["w_rel"].T
    return q


def q_i_j_reference_doc(params, h_all, D_i, sum_all):
    L = h_all.shape[0]
    content = h_all @ params["w_content"].T
    salience = (h_all @ params["w_salience"]) @ D_i.T
    redundancy = -jnp.sum((h_all @ params["w_redundancy"]) * jnp.tanh(sum_all),
                          axis=1, keepdims=True)
    idx = jnp.arange(L)
    abs_p = params["abs_pos_embed"][idx] @ params["w_abs"].T
    rel_id = jnp.clip(jnp.round((idx + 1) * (SEG - 1.0) / L).astype(jnp.int32),
                      0, SEG - 1)
    rel_p = params["rel_pos_embed"][rel_id] @ params["w_rel"].T
    return content + salience + redundancy + abs_p + rel_p + params["bias"]


# ----------------------------- main ------------------------------------------
if __name__ == "__main__":
    key = jax.random.PRNGKey(0)
    kp, kh, kd, ks = jax.random.split(key, 4)
    params = init_params(kp)

    doc_len = 200   # pads to 256 lanes -> 2 parallel grid steps of 128 lanes
    h_all = jax.random.normal(kh, (doc_len, H), jnp.float32)
    D_i = jax.random.normal(kd, (1, H), jnp.float32)
    sum_all = jax.random.normal(ks, (doc_len, H), jnp.float32)

    q = q_i_j_forward_doc(params, h_all, D_i, sum_all)
    q = jax.block_until_ready(q)
    assert q.shape == (doc_len, 1)

    # Full-document check against the pure-f32 reference. The kernel streams
    # h/sum in bf16 and runs the redundancy bilinear in bf16 on the MXU (f32
    # accumulate), so the tolerance is widened accordingly for O(1..10) outputs.
    q_ref = q_i_j_reference_doc(params, h_all, D_i, sum_all)
    max_err = float(jnp.max(jnp.abs(q - q_ref)))
    assert jnp.allclose(q, q_ref, atol=2.5e-1, rtol=2e-2), max_err

    # Spot-check that batching preserves the original per-sentence semantics.
    for i in (0, 7, doc_len - 1):
        q_i = q_i_j_reference(params, h_all[i:i + 1], i, doc_len, D_i,
                              sum_all[i:i + 1])
        assert jnp.allclose(q[i, 0], q_i[0, 0], atol=2.5e-1, rtol=2e-2)

    print("KERNEL_OK")
</pallas_src>

<mosaic_0001>
module attributes {stable_mosaic.version = 11 : i64} {
  func.func @q_i_j_kernel(%arg0: i32, %arg1: memref<128x1xf32, #tpu.memory_space<vmem>>, %arg2: memref<128x128xbf16, #tpu.memory_space<vmem>>, %arg3: memref<128x128xbf16, #tpu.memory_space<vmem>>, %arg4: memref<128x128xbf16, #tpu.memory_space<vmem>>, %arg5: memref<1x128xf32, #tpu.memory_space<vmem>>, %arg6: memref<1x128xf32, #tpu.memory_space<vmem>>) attributes {dimension_semantics = [#tpu.dimension_semantics<parallel>], iteration_bounds = array<i64: 2>, scalar_prefetch = 0 : i64, scratch_operands = 0 : i64, tpu.core_type = #tpu.core_type<tc>, window_params = [{pipeline_mode = #tpu.pipeline_mode<synchronous>, transform_indices = @transform_0, window_bounds = array<i64: 128, 1>}, {pipeline_mode = #tpu.pipeline_mode<synchronous>, transform_indices = @transform_1, window_bounds = array<i64: 128, 128>}, {transform_indices = @transform_2, window_bounds = array<i64: 128, 128>}, {transform_indices = @transform_3, window_bounds = array<i64: 128, 128>}, {transform_indices = @transform_4, window_bounds = array<i64: 1, 128>}, {transform_indices = @transform_5, window_bounds = array<i64: 1, 128>}]} {
    %c0 = arith.constant 0 : index
    %c0_0 = arith.constant 0 : index
    %0 = vector.load %arg3[%c0, %c0_0] : memref<128x128xbf16, #tpu.memory_space<vmem>>, vector<128x128xbf16>
    %1 = arith.extf %0 : vector<128x128xbf16> to vector<128x128xf32>
    %c0_1 = arith.constant 0 : index
    %c0_2 = arith.constant 0 : index
    %2 = vector.load %arg4[%c0_1, %c0_2] : memref<128x128xbf16, #tpu.memory_space<vmem>>, vector<128x128xbf16>
    %3 = arith.extf %2 : vector<128x128xbf16> to vector<128x128xf32>
    %4 = math.tanh %3 : vector<128x128xf32>
    %c0_3 = arith.constant 0 : index
    %c0_4 = arith.constant 0 : index
    %5 = vector.load %arg2[%c0_3, %c0_4] : memref<128x128xbf16, #tpu.memory_space<vmem>>, vector<128x128xbf16>
    %cst = arith.constant dense<0.000000e+00> : vector<128x128xf32>
    %6 = tpu.matmul %5, %0, %cst {dimension_numbers = #tpu.dot_dimension_numbers<[1], [0], [0], [1], [0, 0, 1, 1], [], []>} : vector<128x128xbf16>, vector<128x128xbf16>, vector<128x128xf32> -> vector<128x128xf32>
    %c0_5 = arith.constant 0 : index
    %c0_6 = arith.constant 0 : index
    %7 = vector.load %arg1[%c0_5, %c0_6] : memref<128x1xf32, #tpu.memory_space<vmem>>, vector<128x1xf32>
    %8 = vector.broadcast %7 : vector<128x1xf32> to vector<128x128xf32>
    %9 = arith.mulf %8, %1 : vector<128x128xf32>
    %10 = arith.mulf %6, %4 : vector<128x128xf32>
    %11 = arith.subf %9, %10 : vector<128x128xf32>
    %cst_7 = arith.constant dense<0.000000e+00> : vector<128xf32>
    %12 = vector.multi_reduction <add>, %11, %cst_7 [0] : vector<128x128xf32> to vector<128xf32>
    %13 = vector.shape_cast %12 : vector<128xf32> to vector<1x128xf32>
    %c0_8 = arith.constant 0 : index
    %c0_9 = arith.constant 0 : index
    %14 = vector.load %arg5[%c0_8, %c0_9] : memref<1x128xf32, #tpu.memory_space<vmem>>, vector<1x128xf32>
    %15 = arith.addf %13, %14 : vector<1x128xf32>
    %c0_10 = arith.constant 0 : index
    %c0_11 = arith.constant 0 : index
    %16 = vector.load %arg6[%c0_10, %c0_11] : memref<1x128xf32, #tpu.memory_space<vmem>>, vector<1x128xf32>
    tpu.vector_store %arg6[%c0_10, %c0_11], %15 {strides = array<i32>} : memref<1x128xf32, #tpu.memory_space<vmem>>, vector<1x128xf32>,
    return
  }
  func.func @transform_0(%arg0: i32) -> (i32, i32) {
    %c0_i32 = arith.constant 0 : i32
    %c0_i32_0 = arith.constant 0 : i32
    %c0_i32_1 = arith.constant 0 : i32
    return %c0_i32, %c0_i32_0 : i32, i32
  }
  func.func @transform_1(%arg0: i32) -> (i32, i32) {
    %c0_i32 = arith.constant 0 : i32
    %c0_i32_0 = arith.constant 0 : i32
    %c0_i32_1 = arith.constant 0 : i32
    return %c0_i32, %c0_i32_0 : i32, i32
  }
  func.func @transform_2(%arg0: i32) -> (i32, i32) {
    %c0_i32 = arith.constant 0 : i32
    %c0_i32_0 = arith.constant 0 : i32
    return %c0_i32, %arg0 : i32, i32
  }
  func.func @transform_3(%arg0: i32) -> (i32, i32) {
    %c0_i32 = arith.constant 0 : i32
    %c0_i32_0 = arith.constant 0 : i32
    return %c0_i32, %arg0 : i32, i32
  }
  func.func @transform_4(%arg0: i32) -> (i32, i32) {
    %c0_i32 = arith.constant 0 : i32
    %c0_i32_0 = arith.constant 0 : i32
    return %c0_i32, %arg0 : i32, i32
  }
  func.func @transform_5(%arg0: i32) -> (i32, i32) {
    %c0_i32 = arith.constant 0 : i32
    %c0_i32_0 = arith.constant 0 : i32
    return %c0_i32, %arg0 : i32, i32
  }
}

</mosaic_0001>

<llo_original>
// kernel: q_i_j_forward_doc.1
$region0: #{q_i_j_forward_doc.1}
  #allocation0 [shape = 'u32[]', space=smem, size = 0x4, offset = 0x4, fixed_abs, tag = 'smem constant byte address 0x4 - core index']
  #allocation1 [shape = 'u32[72,128]{1,0:T(1,128)}', space=vmem, size = 0x9000, scoped, tag = 'internal scratch']
  %s0 = inlined_call_operand.vmem [shape: f32[128,1], index: 0, kind: input, shape index: {}]
  %s1 = inlined_call_operand.vmem [shape: bf16[128,128], index: 1, kind: input, shape index: {}]
  %s2 = inlined_call_operand.vmem [shape: bf16[128,256], index: 2, kind: input, shape index: {}]
  %s3 = inlined_call_operand.vmem [shape: bf16[128,256], index: 3, kind: input, shape index: {}]
  %s4 = inlined_call_operand.vmem [shape: f32[1,256], index: 4, kind: input, shape index: {}]
  %s5 = inlined_call_operand.vmem [shape: f32[1,256], index: 5, kind: output, shape index: {}]
  %s6 = sld [smem:[#allocation0]]
  $region135: #{q_i_j_forward_doc.1} parent=0
    _
  %s8 = ssub.s32 1, %s6
  %s9 = scalar_select 0, %s8, %s6
  $region1: #{q_i_j_forward_doc.1} parent=0
    #allocation2 [shape = 'u8[65536]{0}', space=vmem, size = 0x10000, scoped, tag = 'input window, operand 2']
    #allocation3 [shape = 'u8[65536]{0}', space=vmem, size = 0x10000, scoped, tag = 'input window, operand 3']
    loop: start=0, step=1, limit=4
    $region2: #{q_i_j_forward_doc.1} parent=1 // loop_pre_header
      _
    $region3: #{q_i_j_forward_doc.1} parent=1 // loop_header
      %s11 = sphi 0, %s15
      %p12 = scmp.ge.s32.totalorder %s11, 4
      %s19 = sphi 0, %s19
      %s21 = sphi 0, %s19
      %s22 = sphi 0, %s21
      %s36 = sphi 0, %s22
      %s40 = sphi 0, %s40
      %s42 = sphi 0, %s40
      %s43 = sphi 0, %s42
      %s57 = sphi 0, %s43
      %s63 = sphi 0, %s65
      %s66 = sphi 0, %s63
      %s67 = sphi 0, %s66
      %s83 = sphi 0, %s67
      %s89 = sphi 0, %s91
      %s92 = sphi 0, %s89
      %s93 = sphi 0, %s92
      %s109 = sphi 0, %s93
      %s115 = sphi 0, %s117
      %s118 = sphi 0, %s115
      %s119 = sphi 0, %s118
      %s135 = sphi 0, %s119
      %s141 = sphi 0, %s143
      %s144 = sphi 0, %s141
      %s145 = sphi 0, %s144
      %s161 = sphi 0, %s145
    $region4: #{q_i_j_forward_doc.1} parent=1 // loop_header_branch
      %14 = sbr.rel (%p12) target = $region8
    $region5: #{q_i_j_forward_doc.1} parent=1 // loop_body
      %s16 = ssub.s32 %s11, 1
      %s17 = ssub.s32 %s11, 2
      %s18 = sadd.s32 %s11, 1
      %s20 = sadd.s32 %s19, 1
      %p23 = scmp.eq.s32.totalorder %s11, 1
      %p24 = scmp.ne.s32.totalorder %s19, %s21
      %p25 = scmp.eq.s32.totalorder %s11, 0
      %p26 = por %p24, %p25
      %p27 = scmp.ne.s32.totalorder %s19, %s21
      %p28 = scmp.eq.s32.totalorder %s16, 1
      %p29 = por %p27, %p28
      %p30 = scmp.ne.s32.totalorder %s21, %s22
      %p31 = scmp.eq.s32.totalorder %s16, 0
      %p32 = por %p30, %p31
      %p33 = scmp.ne.s32.totalorder %s21, %s22
      %p34 = scmp.eq.s32.totalorder %s17, 1
      %p35 = por %p33, %p34
      %p37 = scmp.ne.s32.totalorder %s22, %s36
      %p38 = scmp.eq.s32.totalorder %s17, 0
      %p39 = por %p37, %p38
      %s41 = sadd.s32 %s40, 1
      %p44 = scmp.eq.s32.totalorder %s11, 1
      %p45 = scmp.ne.s32.totalorder %s40, %s42
      %p46 = scmp.eq.s32.totalorder %s11, 0
      %p47 = por %p45, %p46
      %p48 = scmp.ne.s32.totalorder %s40, %s42
      %p49 = scmp.eq.s32.totalorder %s16, 1
      %p50 = por %p48, %p49
      %p51 = scmp.ne.s32.totalorder %s42, %s43
      %p52 = scmp.eq.s32.totalorder %s16, 0
      %p53 = por %p51, %p52
      %p54 = scmp.ne.s32.totalorder %s42, %s43
      %p55 = scmp.eq.s32.totalorder %s17, 1
      %p56 = por %p54, %p55
      %p58 = scmp.ne.s32.totalorder %s43, %s57
      %p59 = scmp.eq.s32.totalorder %s17, 0
      %p60 = por %p58, %p59
      %s61 = ssub.s32 %s11, %s18
      %p62 = scmp.eq.s32.totalorder %s61, 0
      %s64 = sadd.s32 %s63, 1
      %s65 = scalar_select %p62, %s63, %s64
      %p68 = pneg %p62
      %p69 = scmp.eq.s32.totalorder %s11, 1
      %p70 = por %p68, %p69
      %p71 = scmp.ne.s32.totalorder %s63, %s66
      %p72 = scmp.eq.s32.totalorder %s11, 0
      %p73 = por %p71, %p72
      %p74 = scmp.ne.s32.totalorder %s63, %s66
      %p75 = scmp.eq.s32.totalorder %s16, 1
      %p76 = por %p74, %p75
      %p77 = scmp.ne.s32.totalorder %s66, %s67
      %p78 = scmp.eq.s32.totalorder %s16, 0
      %p79 = por %p77, %p78
      %p80 = scmp.ne.s32.totalorder %s66, %s67
      %p81 = scmp.eq.s32.totalorder %s17, 1
      %p82 = por %p80, %p81
      %p84 = scmp.ne.s32.totalorder %s67, %s83
      %p85 = scmp.eq.s32.totalorder %s17, 0
      %p86 = por %p84, %p85
      %s87 = ssub.s32 %s11, %s18
      %p88 = scmp.eq.s32.totalorder %s87, 0
      %s90 = sadd.s32 %s89, 1
      %s91 = scalar_select %p88, %s89, %s90
      %p94 = pneg %p88
      %p95 = scmp.eq.s32.totalorder %s11, 1
      %p96 = por %p94, %p95
      %p97 = scmp.ne.s32.totalorder %s89, %s92
      %p98 = scmp.eq.s32.totalorder %s11, 0
      %p99 = por %p97, %p98
      %p100 = scmp.ne.s32.totalorder %s89, %s92
      %p101 = scmp.eq.s32.totalorder %s16, 1
      %p102 = por %p100, %p101
      %p103 = scmp.ne.s32.totalorder %s92, %s93
      %p104 = scmp.eq.s32.totalorder %s16, 0
      %p105 = por %p103, %p104
      %p106 = scmp.ne.s32.totalorder %s92, %s93
      %p107 = scmp.eq.s32.totalorder %s17, 1
      %p108 = por %p106, %p107
      %p110 = scmp.ne.s32.totalorder %s93, %s109
      %p111 = scmp.eq.s32.totalorder %s17, 0
      %p112 = por %p110, %p111
      %s113 = ssub.s32 %s11, %s18
      %p114 = scmp.eq.s32.totalorder %s113, 0
      %s116 = sadd.s32 %s115, 1
      %s117 = scalar_select %p114, %s115, %s116
      %p120 = pneg %p114
      %p121 = scmp.eq.s32.totalorder %s11, 1
      %p122 = por %p120, %p121
      %p123 = scmp.ne.s32.totalorder %s115, %s118
      %p124 = scmp.eq.s32.totalorder %s11, 0
      %p125 = por %p123, %p124
      %p126 = scmp.ne.s32.totalorder %s115, %s118
      %p127 = scmp.eq.s32.totalorder %s16, 1
      %p128 = por %p126, %p127
      %p129 = scmp.ne.s32.totalorder %s118, %s119
      %p130 = scmp.eq.s32.totalorder %s16, 0
      %p131 = por %p129, %p130
      %p132 = scmp.ne.s32.totalorder %s118, %s119
      %p133 = scmp.eq.s32.totalorder %s17, 1
      %p134 = por %p132, %p133
      %p136 = scmp.ne.s32.totalorder %s119, %s135
      %p137 = scmp.eq.s32.totalorder %s17, 0
      %p138 = por %p136, %p137
      %s139 = ssub.s32 %s11, %s18
      %p140 = scmp.eq.s32.totalorder %s139, 0
      %s142 = sadd.s32 %s141, 1
      %s143 = scalar_select %p140, %s141, %s142
      %p146 = pneg %p140
      %p147 = scmp.eq.s32.totalorder %s11, 1
      %p148 = por %p146, %p147
      %p149 = scmp.ne.s32.totalorder %s141, %s144
      %p150 = scmp.eq.s32.totalorder %s11, 0
      %p151 = por %p149, %p150
      %p152 = scmp.ne.s32.totalorder %s141, %s144
      %p153 = scmp.eq.s32.totalorder %s16, 1
      %p154 = por %p152, %p153
      %p155 = scmp.ne.s32.totalorder %s144, %s145
      %p156 = scmp.eq.s32.totalorder %s16, 0
      %p157 = por %p155, %p156
      %p158 = scmp.ne.s32.totalorder %s144, %s145
      %p159 = scmp.eq.s32.totalorder %s17, 1
      %p160 = por %p158, %p159
      %p162 = scmp.ne.s32.totalorder %s145, %s161
      %p163 = scmp.eq.s32.totalorder %s17, 0
      %p164 = por %p162, %p163
      %p165 = scmp.le.s32.totalorder 1, %s11
      %p166 = scmp.lt.s32.totalorder %s11, 3
      %p167 = pnand %p165, %p166
      %p168 = pneg %p167
      // Predicated region
      $region9: #{q_i_j_forward_doc.1} parent=5 // pred_check
        _
      $region10: #{q_i_j_forward_doc.1} parent=5 // pred_check_branch
        %170 = sbr.rel (%p167) target = $region12
      $region11: #{q_i_j_forward_doc.1} parent=5 // pred_region
        %s171 = ssub.s32 %s11, 1
        // Predicated region
        $region13: #{q_i_j_forward_doc.1} parent=11 // pred_check
          %p172 = pneg %p32
        $region14: #{q_i_j_forward_doc.1} parent=11 // pred_check_branch
          %174 = sbr.rel (%p172) target = $region16
        $region15: #{q_i_j_forward_doc.1} parent=11 // pred_region
          _
        $region16: #{q_i_j_forward_doc.1} parent=11 // pred_fallthru
          _
        // Predicated region
        $region17: #{q_i_j_forward_doc.1} parent=11 // pred_check
          %p175 = pneg %p53
        $region18: #{q_i_j_forward_doc.1} parent=11 // pred_check_branch
          %177 = sbr.rel (%p175) target = $region20
        $region19: #{q_i_j_forward_doc.1} parent=11 // pred_region
          _
        $region20: #{q_i_j_forward_doc.1} parent=11 // pred_fallthru
          _
      $region12: #{q_i_j_forward_doc.1} parent=5 // pred_fallthru
        _
      %p178 = scmp.lt.s32.totalorder %s11, 2
      // Predicated region
      $region21: #{q_i_j_forward_doc.1} parent=5 // pred_check
        %p179 = pneg %p178
      $region22: #{q_i_j_forward_doc.1} parent=5 // pred_check_branch
        %181 = sbr.rel (%p179) target = $region24
      $region23: #{q_i_j_forward_doc.1} parent=5 // pred_region
        // Predicated region
        $region25: #{q_i_j_forward_doc.1} parent=23 // pred_check
          %p182 = pneg %p73
        $region26: #{q_i_j_forward_doc.1} parent=23 // pred_check_branch
          %184 = sbr.rel (%p182) target = $region28
        $region27: #{q_i_j_forward_doc.1} parent=23 // pred_region
          %s185 = sand.u32 %s63, 1
          %s186 = sand.u32 %s63, 1
          %s187 = smul.addr %s186, 64
          %s188 = scalar_lea.vmem [#allocation2], %s187
          %s189 = smul.addr %s11, 4
          %s190 = scalar_lea.vmem %s2, %s189
          // Predicated region
          $region29: #{q_i_j_forward_doc.1} parent=27 // pred_check
            _
          $region30: #{q_i_j_forward_doc.1} parent=27 // pred_check_branch
            %192 = sbr.rel (0) target = $region32
          $region31: #{q_i_j_forward_doc.1} parent=27 // pred_region
            // Predicated region
            $region33: #{q_i_j_forward_doc.1} parent=31 // pred_check
              _
            $region34: #{q_i_j_forward_doc.1} parent=31 // pred_check_branch
              %194 = sbr.rel target = $region36
            $region35: #{q_i_j_forward_doc.1} parent=31 // pred_region
              // Predicated region
              $region48: #{q_i_j_forward_doc.1} parent=35 // pred_check
                _
              $region49: #{q_i_j_forward_doc.1} parent=35 // pred_check_branch
                %240 = sbr.rel (0) target = $region51
              $region50: #{q_i_j_forward_doc.1} parent=35 // pred_region
                loop: start=0, step=1, limit=1
                $region52: #{q_i_j_forward_doc.1} parent=50 // loop_pre_header
                  _
                $region53: #{q_i_j_forward_doc.1} parent=50 // loop_header
                  %s242 = sphi 0, %s246
                  %p243 = scmp.ge.s32.totalorder %s242, 1
                  %s247 = sphi %s190, %s190
                  %s248 = sphi %s188, %s188
                $region54: #{q_i_j_forward_doc.1} parent=50 // loop_header_branch
                  %245 = sbr.rel (%p243) target = $region58
                $region55: #{q_i_j_forward_doc.1} parent=50 // loop_body
                  _
                $region56: #{q_i_j_forward_doc.1} parent=50 // loop_footer
                  %s246 = sadd.s32 1, %s242
                $region57: #{q_i_j_forward_doc.1} parent=50 // loop_footer_branch
                  %241 = sbr.rel target = $region53
                $region58: #{q_i_j_forward_doc.1} parent=50 // loop_exit
                  _
                %s250 = ssub.s32 16, 1
                loop: start=0, step=1, limit=1
                $region59: #{q_i_j_forward_doc.1} parent=50 // loop_pre_header
                  _
                $region60: #{q_i_j_forward_doc.1} parent=50 // loop_header
                  %s252 = sphi 0, %s256
                  %p253 = scmp.ge.s32.totalorder %s252, 1
                  %s257 = sphi %s190, %s190
                  %s258 = sphi %s188, %s188
                $region61: #{q_i_j_forward_doc.1} parent=50 // loop_header_branch
                  %255 = sbr.rel (%p253) target = $region65
                $region62: #{q_i_j_forward_doc.1} parent=50 // loop_body
                  %v259 = vld [vmem:[%s257] sm:%s250]
                  %260 = vst [vmem:[%s258] sm:%s250] %v259
                  %v261 = vld [vmem:[%s257 + $0x8] sm:%s250]
                  %262 = vst [vmem:[%s258 + $0x4] sm:%s250] %v261
                  %v263 = vld [vmem:[%s257 + $0x10] sm:%s250]
                  %264 = vst [vmem:[%s258 + $0x8] sm:%s250] %v263
                  %v265 = vld [vmem:[%s257 + $0x18] sm:%s250]
                  %266 = vst [vmem:[%s258 + $0xc] sm:%s250] %v265
                  %v267 = vld [vmem:[%s257 + $0x20] sm:%s250]
                  %268 = vst [vmem:[%s258 + $0x10] sm:%s250] %v267
                  %v269 = vld [vmem:[%s257 + $0x28] sm:%s250]
                  %270 = vst [vmem:[%s258 + $0x14] sm:%s250] %v269
                  %v271 = vld [vmem:[%s257 + $0x30] sm:%s250]
                  %272 = vst [vmem:[%s258 + $0x18] sm:%s250] %v271
                  %v273 = vld [vmem:[%s257 + $0x38] sm:%s250]
                  %274 = vst [vmem:[%s258 + $0x1c] sm:%s250] %v273
                  %v275 = vld [vmem:[%s257 + $0x40] sm:%s250]
                  %276 = vst [vmem:[%s258 + $0x20] sm:%s250] %v275
                  %v277 = vld [vmem:[%s257 + $0x48] sm:%s250]
                  %278 = vst [vmem:[%s258 + $0x24] sm:%s250] %v277
                  %v279 = vld [vmem:[%s257 + $0x50] sm:%s250]
                  %280 = vst [vmem:[%s258 + $0x28] sm:%s250] %v279
                  %v281 = vld [vmem:[%s257 + $0x58] sm:%s250]
                  %282 = vst [vmem:[%s258 + $0x2c] sm:%s250] %v281
                  %v283 = vld [vmem:[%s257 + $0x60] sm:%s250]
                  %284 = vst [vmem:[%s258 + $0x30] sm:%s250] %v283
                  %v285 = vld [vmem:[%s257 + $0x68] sm:%s250]
                  %286 = vst [vmem:[%s258 + $0x34] sm:%s250] %v285
                  %v287 = vld [vmem:[%s257 + $0x70] sm:%s250]
                  %288 = vst [vmem:[%s258 + $0x38] sm:%s250] %v287
                  %v289 = vld [vmem:[%s257 + $0x78] sm:%s250]
                  %290 = vst [vmem:[%s258 + $0x3c] sm:%s250] %v289
                $region63: #{q_i_j_forward_doc.1} parent=50 // loop_footer
                  %s256 = sadd.s32 1, %s252
                $region64: #{q_i_j_forward_doc.1} parent=50 // loop_footer_branch
                  %251 = sbr.rel target = $region60
                $region65: #{q_i_j_forward_doc.1} parent=50 // loop_exit
                  _
              $region51: #{q_i_j_forward_doc.1} parent=35 // pred_fallthru
                _
            $region36: #{q_i_j_forward_doc.1} parent=31 // pred_fallthru
              _
            // Predicated region
            $region37: #{q_i_j_forward_doc.1} parent=31 // pred_check
              _
            $region38: #{q_i_j_forward_doc.1} parent=31 // pred_check_branch
              %196 = sbr.rel (0) target = $region40
            $region39: #{q_i_j_forward_doc.1} parent=31 // pred_region
              %s198 = ssub.s32 16, 1
              loop: start=0, step=1, limit=1
              $region41: #{q_i_j_forward_doc.1} parent=39 // loop_pre_header
                _
              $region42: #{q_i_j_forward_doc.1} parent=39 // loop_header
                %s200 = sphi 0, %s204
                %p201 = scmp.ge.s32.totalorder %s200, 1
                %s205 = sphi %s190, %s190
                %s206 = sphi %s188, %s188
              $region43: #{q_i_j_forward_doc.1} parent=39 // loop_header_branch
                %203 = sbr.rel (%p201) target = $region47
              $region44: #{q_i_j_forward_doc.1} parent=39 // loop_body
                %v207 = vld [vmem:[%s205] sm:%s198]
                %208 = vst [vmem:[%s206] sm:%s198] %v207
                %v209 = vld [vmem:[%s205 + $0x8] sm:%s198]
                %210 = vst [vmem:[%s206 + $0x4] sm:%s198] %v209
                %v211 = vld [vmem:[%s205 + $0x10] sm:%s198]
                %212 = vst [vmem:[%s206 + $0x8] sm:%s198] %v211
                %v213 = vld [vmem:[%s205 + $0x18] sm:%s198]
                %214 = vst [vmem:[%s206 + $0xc] sm:%s198] %v213
                %v215 = vld [vmem:[%s205 + $0x20] sm:%s198]
                %216 = vst [vmem:[%s206 + $0x10] sm:%s198] %v215
                %v217 = vld [vmem:[%s205 + $0x28] sm:%s198]
                %218 = vst [vmem:[%s206 + $0x14] sm:%s198] %v217
                %v219 = vld [vmem:[%s205 + $0x30] sm:%s198]
                %220 = vst [vmem:[%s206 + $0x18] sm:%s198] %v219
                %v221 = vld [vmem:[%s205 + $0x38] sm:%s198]
                %222 = vst [vmem:[%s206 + $0x1c] sm:%s198] %v221
                %v223 = vld [vmem:[%s205 + $0x40] sm:%s198]
                %224 = vst [vmem:[%s206 + $0x20] sm:%s198] %v223
                %v225 = vld [vmem:[%s205 + $0x48] sm:%s198]
                %226 = vst [vmem:[%s206 + $0x24] sm:%s198] %v225
                %v227 = vld [vmem:[%s205 + $0x50] sm:%s198]
                %228 = vst [vmem:[%s206 + $0x28] sm:%s198] %v227
                %v229 = vld [vmem:[%s205 + $0x58] sm:%s198]
                %230 = vst [vmem:[%s206 + $0x2c] sm:%s198] %v229
                %v231 = vld [vmem:[%s205 + $0x60] sm:%s198]
                %232 = vst [vmem:[%s206 + $0x30] sm:%s198] %v231
                %v233 = vld [vmem:[%s205 + $0x68] sm:%s198]
                %234 = vst [vmem:[%s206 + $0x34] sm:%s198] %v233
                %v235 = vld [vmem:[%s205 + $0x70] sm:%s198]
                %236 = vst [vmem:[%s206 + $0x38] sm:%s198] %v235
                %v237 = vld [vmem:[%s205 + $0x78] sm:%s198]
                %238 = vst [vmem:[%s206 + $0x3c] sm:%s198] %v237
              $region45: #{q_i_j_forward_doc.1} parent=39 // loop_footer
                %s204 = sadd.s32 1, %s200
              $region46: #{q_i_j_forward_doc.1} parent=39 // loop_footer_branch
                %199 = sbr.rel target = $region42
              $region47: #{q_i_j_forward_doc.1} parent=39 // loop_exit
                _
            $region40: #{q_i_j_forward_doc.1} parent=31 // pred_fallthru
              _
          $region32: #{q_i_j_forward_doc.1} parent=27 // pred_fallthru
            _
          %291 = vnop
        $region28: #{q_i_j_forward_doc.1} parent=23 // pred_fallthru
          _
        // Predicated region
        $region66: #{q_i_j_forward_doc.1} parent=23 // pred_check
          %p292 = pneg %p99
        $region67: #{q_i_j_forward_doc.1} parent=23 // pred_check_branch
          %294 = sbr.rel (%p292) target = $region69
        $region68: #{q_i_j_forward_doc.1} parent=23 // pred_region
          %s295 = sand.u32 %s89, 1
          %s296 = sand.u32 %s89, 1
          %s297 = smul.addr %s296, 64
          %s298 = scalar_lea.vmem [#allocation3], %s297
          %s299 = smul.addr %s11, 4
          %s300 = scalar_lea.vmem %s3, %s299
          // Predicated region
          $region70: #{q_i_j_forward_doc.1} parent=68 // pred_check
            _
          $region71: #{q_i_j_forward_doc.1} parent=68 // pred_check_branch
            %302 = sbr.rel (0) target = $region73
          $region72: #{q_i_j_forward_doc.1} parent=68 // pred_region
            // Predicated region
            $region74: #{q_i_j_forward_doc.1} parent=72 // pred_check
              _
            $region75: #{q_i_j_forward_doc.1} parent=72 // pred_check_branch
              %304 = sbr.rel target = $region77
            $region76: #{q_i_j_forward_doc.1} parent=72 // pred_region
              // Predicated region
              $region89: #{q_i_j_forward_doc.1} parent=76 // pred_check
                _
              $region90: #{q_i_j_forward_doc.1} parent=76 // pred_check_branch
                %350 = sbr.rel (0) target = $region92
              $region91: #{q_i_j_forward_doc.1} parent=76 // pred_region
                loop: start=0, step=1, limit=1
                $region93: #{q_i_j_forward_doc.1} parent=91 // loop_pre_header
                  _
                $region94: #{q_i_j_forward_doc.1} parent=91 // loop_header
                  %s352 = sphi 0, %s356
                  %p353 = scmp.ge.s32.totalorder %s352, 1
                  %s357 = sphi %s300, %s300
                  %s358 = sphi %s298, %s298
                $region95: #{q_i_j_forward_doc.1} parent=91 // loop_header_branch
                  %355 = sbr.rel (%p353) target = $region99
                $region96: #{q_i_j_forward_doc.1} parent=91 // loop_body
                  _
                $region97: #{q_i_j_forward_doc.1} parent=91 // loop_footer
                  %s356 = sadd.s32 1, %s352
                $region98: #{q_i_j_forward_doc.1} parent=91 // loop_footer_branch
                  %351 = sbr.rel target = $region94
                $region99: #{q_i_j_forward_doc.1} parent=91 // loop_exit
                  _
                %s360 = ssub.s32 16, 1
                loop: start=0, step=1, limit=1
                $region100: #{q_i_j_forward_doc.1} parent=91 // loop_pre_header
                  _
                $region101: #{q_i_j_forward_doc.1} parent=91 // loop_header
                  %s362 = sphi 0, %s366
                  %p363 = scmp.ge.s32.totalorder %s362, 1
                  %s367 = sphi %s300, %s300
                  %s368 = sphi %s298, %s298
                $region102: #{q_i_j_forward_doc.1} parent=91 // loop_header_branch
                  %365 = sbr.rel (%p363) target = $region106
                $region103: #{q_i_j_forward_doc.1} parent=91 // loop_body
                  %v369 = vld [vmem:[%s367] sm:%s360]
                  %370 = vst [vmem:[%s368] sm:%s360] %v369
                  %v371 = vld [vmem:[%s367 + $0x8] sm:%s360]
                  %372 = vst [vmem:[%s368 + $0x4] sm:%s360] %v371
                  %v373 = vld [vmem:[%s367 + $0x10] sm:%s360]
                  %374 = vst [vmem:[%s368 + $0x8] sm:%s360] %v373
                  %v375 = vld [vmem:[%s367 + $0x18] sm:%s360]
                  %376 = vst [vmem:[%s368 + $0xc] sm:%s360] %v375
                  %v377 = vld [vmem:[%s367 + $0x20] sm:%s360]
                  %378 = vst [vmem:[%s368 + $0x10] sm:%s360] %v377
                  %v379 = vld [vmem:[%s367 + $0x28] sm:%s360]
                  %380 = vst [vmem:[%s368 + $0x14] sm:%s360] %v379
                  %v381 = vld [vmem:[%s367 + $0x30] sm:%s360]
                  %382 = vst [vmem:[%s368 + $0x18] sm:%s360] %v381
                  %v383 = vld [vmem:[%s367 + $0x38] sm:%s360]
                  %384 = vst [vmem:[%s368 + $0x1c] sm:%s360] %v383
                  %v385 = vld [vmem:[%s367 + $0x40] sm:%s360]
                  %386 = vst [vmem:[%s368 + $0x20] sm:%s360] %v385
                  %v387 = vld [vmem:[%s367 + $0x48] sm:%s360]
                  %388 = vst [vmem:[%s368 + $0x24] sm:%s360] %v387
                  %v389 = vld [vmem:[%s367 + $0x50] sm:%s360]
                  %390 = vst [vmem:[%s368 + $0x28] sm:%s360] %v389
                  %v391 = vld [vmem:[%s367 + $0x58] sm:%s360]
                  %392 = vst [vmem:[%s368 + $0x2c] sm:%s360] %v391
                  %v393 = vld [vmem:[%s367 + $0x60] sm:%s360]
                  %394 = vst [vmem:[%s368 + $0x30] sm:%s360] %v393
                  %v395 = vld [vmem:[%s367 + $0x68] sm:%s360]
                  %396 = vst [vmem:[%s368 + $0x34] sm:%s360] %v395
                  %v397 = vld [vmem:[%s367 + $0x70] sm:%s360]
                  %398 = vst [vmem:[%s368 + $0x38] sm:%s360] %v397
                  %v399 = vld [vmem:[%s367 + $0x78] sm:%s360]
                  %400 = vst [vmem:[%s368 + $0x3c] sm:%s360] %v399
                $region104: #{q_i_j_forward_doc.1} parent=91 // loop_footer
                  %s366 = sadd.s32 1, %s362
                $region105: #{q_i_j_forward_doc.1} parent=91 // loop_footer_branch
                  %361 = sbr.rel target = $region101
                $region106: #{q_i_j_forward_doc.1} parent=91 // loop_exit
                  _
              $region92: #{q_i_j_forward_doc.1} parent=76 // pred_fallthru
                _
            $region77: #{q_i_j_forward_doc.1} parent=72 // pred_fallthru
              _
            // Predicated region
            $region78: #{q_i_j_forward_doc.1} parent=72 // pred_check
              _
            $region79: #{q_i_j_forward_doc.1} parent=72 // pred_check_branch
              %306 = sbr.rel (0) target = $region81
            $region80: #{q_i_j_forward_doc.1} parent=72 // pred_region
              %s308 = ssub.s32 16, 1
              loop: start=0, step=1, limit=1
              $region82: #{q_i_j_forward_doc.1} parent=80 // loop_pre_header
                _
              $region83: #{q_i_j_forward_doc.1} parent=80 // loop_header
                %s310 = sphi 0, %s314
                %p311 = scmp.ge.s32.totalorder %s310, 1
                %s315 = sphi %s300, %s300
                %s316 = sphi %s298, %s298
              $region84: #{q_i_j_forward_doc.1} parent=80 // loop_header_branch
                %313 = sbr.rel (%p311) target = $region88
              $region85: #{q_i_j_forward_doc.1} parent=80 // loop_body
                %v317 = vld [vmem:[%s315] sm:%s308]
                %318 = vst [vmem:[%s316] sm:%s308] %v317
                %v319 = vld [vmem:[%s315 + $0x8] sm:%s308]
                %320 = vst [vmem:[%s316 + $0x4] sm:%s308] %v319
                %v321 = vld [vmem:[%s315 + $0x10] sm:%s308]
                %322 = vst [vmem:[%s316 + $0x8] sm:%s308] %v321
                %v323 = vld [vmem:[%s315 + $0x18] sm:%s308]
                %324 = vst [vmem:[%s316 + $0xc] sm:%s308] %v323
                %v325 = vld [vmem:[%s315 + $0x20] sm:%s308]
                %326 = vst [vmem:[%s316 + $0x10] sm:%s308] %v325
                %v327 = vld [vmem:[%s315 + $0x28] sm:%s308]
                %328 = vst [vmem:[%s316 + $0x14] sm:%s308] %v327
                %v329 = vld [vmem:[%s315 + $0x30] sm:%s308]
                %330 = vst [vmem:[%s316 + $0x18] sm:%s308] %v329
                %v331 = vld [vmem:[%s315 + $0x38] sm:%s308]
                %332 = vst [vmem:[%s316 + $0x1c] sm:%s308] %v331
                %v333 = vld [vmem:[%s315 + $0x40] sm:%s308]
                %334 = vst [vmem:[%s316 + $0x20] sm:%s308] %v333
                %v335 = vld [vmem:[%s315 + $0x48] sm:%s308]
                %336 = vst [vmem:[%s316 + $0x24] sm:%s308] %v335
                %v337 = vld [vmem:[%s315 + $0x50] sm:%s308]
                %338 = vst [vmem:[%s316 + $0x28] sm:%s308] %v337
                %v339 = vld [vmem:[%s315 + $0x58] sm:%s308]
                %340 = vst [vmem:[%s316 + $0x2c] sm:%s308] %v339
                %v341 = vld [vmem:[%s315 + $0x60] sm:%s308]
                %342 = vst [vmem:[%s316 + $0x30] sm:%s308] %v341
                %v343 = vld [vmem:[%s315 + $0x68] sm:%s308]
                %344 = vst [vmem:[%s316 + $0x34] sm:%s308] %v343
                %v345 = vld [vmem:[%s315 + $0x70] sm:%s308]
                %346 = vst [vmem:[%s316 + $0x38] sm:%s308] %v345
                %v347 = vld [vmem:[%s315 + $0x78] sm:%s308]
                %348 = vst [vmem:[%s316 + $0x3c] sm:%s308] %v347
              $region86: #{q_i_j_forward_doc.1} parent=80 // loop_footer
                %s314 = sadd.s32 1, %s310
              $region87: #{q_i_j_forward_doc.1} parent=80 // loop_footer_branch
                %309 = sbr.rel target = $region83
              $region88: #{q_i_j_forward_doc.1} parent=80 // loop_exit
                _
            $region81: #{q_i_j_forward_doc.1} parent=72 // pred_fallthru
              _
          $region73: #{q_i_j_forward_doc.1} parent=68 // pred_fallthru
            _
          %401 = vnop
        $region69: #{q_i_j_forward_doc.1} parent=23 // pred_fallthru
          _
        // Predicated region
        $region107: #{q_i_j_forward_doc.1} parent=23 // pred_check
          %p402 = pneg %p125
        $region108: #{q_i_j_forward_doc.1} parent=23 // pred_check_branch
          %404 = sbr.rel (%p402) target = $region110
        $region109: #{q_i_j_forward_doc.1} parent=23 // pred_region
          %p405 = scmp.lt.s32.totalorder %s11, 1
          %s406 = scalar_select %p405, %s11, 1
          %s407 = scalar_lea.vmem %s4, %s406
        $region110: #{q_i_j_forward_doc.1} parent=23 // pred_fallthru
          _
      $region24: #{q_i_j_forward_doc.1} parent=5 // pred_fallthru
        _
      %p408 = scmp.le.s32.totalorder 1, %s11
      %p409 = scmp.lt.s32.totalorder %s11, 3
      %p410 = pnand %p408, %p409
      %p411 = pneg %p410
      // Predicated region
      $region111: #{q_i_j_forward_doc.1} parent=5 // pred_check
        _
      $region112: #{q_i_j_forward_doc.1} parent=5 // pred_check_branch
        %413 = sbr.rel (%p410) target = $region114
      $region113: #{q_i_j_forward_doc.1} parent=5 // pred_region
        %s414 = ssub.s32 %s11, 1
        %s415 = sand.u32 %s66, 1
        %s416 = sand.u32 %s66, 1
        %s417 = smul.addr %s416, 64
        %s418 = scalar_lea.vmem [#allocation2], %s417
        // Predicated region
        $region115: #{q_i_j_forward_doc.1} parent=113 // pred_check
          %p419 = pneg %p79
        $region116: #{q_i_j_forward_doc.1} parent=113 // pred_check_branch
          %421 = sbr.rel (%p419) target = $region118
        $region117: #{q_i_j_forward_doc.1} parent=113 // pred_region
          _
        $region118: #{q_i_j_forward_doc.1} parent=113 // pred_fallthru
          _
        %s422 = sand.u32 %s92, 1
        %s423 = sand.u32 %s92, 1
        %s424 = smul.addr %s423, 64
        %s425 = scalar_lea.vmem [#allocation3], %s424
        // Predicated region
        $region119: #{q_i_j_forward_doc.1} parent=113 // pred_check
          %p426 = pneg %p105
        $region120: #{q_i_j_forward_doc.1} parent=113 // pred_check_branch
          %428 = sbr.rel (%p426) target = $region122
        $region121: #{q_i_j_forward_doc.1} parent=113 // pred_region
          _
        $region122: #{q_i_j_forward_doc.1} parent=113 // pred_fallthru
          _
        %p429 = pneg %p32
        %p430 = pneg %p29
        %p431 = pneg %p53
        %p432 = pneg %p50
        %s433 = sand.u32 %s66, 1
        %s434 = sand.u32 %s66, 1
        %s435 = smul.addr %s434, 64
        %s436 = scalar_lea.vmem [#allocation2], %s435
        %p437 = pneg %p79
        %p438 = pneg %p76
        %s439 = sand.u32 %s92, 1
        %s440 = sand.u32 %s92, 1
        %s441 = smul.addr %s440, 64
        %s442 = scalar_lea.vmem [#allocation3], %s441
        %p443 = pneg %p105
        %p444 = pneg %p102
        %p445 = scmp.lt.s32.totalorder %s16, 1
        %s446 = scalar_select %p445, %s16, 1
        %s447 = scalar_lea.vmem %s4, %s446
        %p448 = pneg %p131
        %p449 = pneg %p128
        %p450 = pneg %p157
        %p451 = pneg %p154
        %p452 = scmp.lt.s32.totalorder %s16, 1
        %s453 = scalar_select %p452, %s16, 1
        %s454 = scalar_lea.vmem %s5, %s453
        %p455 = scmp.lt.s32.totalorder %s16, 1
        %s456 = scalar_select %p455, %s16, 1
        %s457 = scalar_lea.vmem %s4, %s456
        %p458 = scmp.lt.s32.totalorder %s16, 1
        %s459 = scalar_select %p458, %s16, 1
        %s460 = scalar_lea.vmem %s5, %s459
        %v461 = vld [vmem:[%s418] sm:$0xf]
        %v462 = vld [vmem:[%s418 + $0x4] sm:$0xf]
        %v463 = vld [vmem:[%s418 + $0x8] sm:$0xf]
        %v464 = vld [vmem:[%s418 + $0xc] sm:$0xf]
        %v465 = vld [vmem:[%s418 + $0x10] sm:$0xf]
        %v466 = vld [vmem:[%s418 + $0x14] sm:$0xf]
        %v467 = vld [vmem:[%s418 + $0x18] sm:$0xf]
        %v468 = vld [vmem:[%s418 + $0x1c] sm:$0xf]
        %v469 = vld [vmem:[%s418 + $0x20] sm:$0xf]
        %v470 = vld [vmem:[%s418 + $0x24] sm:$0xf]
        %v471 = vld [vmem:[%s418 + $0x28] sm:$0xf]
        %v472 = vld [vmem:[%s418 + $0x2c] sm:$0xf]
        %v473 = vld [vmem:[%s418 + $0x30] sm:$0xf]
        %v474 = vld [vmem:[%s418 + $0x34] sm:$0xf]
        %v475 = vld [vmem:[%s418 + $0x38] sm:$0xf]
        %v476 = vld [vmem:[%s418 + $0x3c] sm:$0xf]
        %v477 = vunpack.c.l.bf16 %v461
        %v478 = vunpack.c.l.bf16 %v462
        %v479 = vunpack.c.l.bf16 %v463
        %v480 = vunpack.c.l.bf16 %v464
        %v481 = vunpack.c.l.bf16 %v465
        %v482 = vunpack.c.l.bf16 %v466
        %v483 = vunpack.c.l.bf16 %v467
        %v484 = vunpack.c.l.bf16 %v468
        %v485 = vunpack.c.l.bf16 %v469
        %v486 = vunpack.c.l.bf16 %v470
        %v487 = vunpack.c.l.bf16 %v471
        %v488 = vunpack.c.l.bf16 %v472
        %v489 = vunpack.c.l.bf16 %v473
        %v490 = vunpack.c.l.bf16 %v474
        %v491 = vunpack.c.l.bf16 %v475
        %v492 = vunpack.c.l.bf16 %v476
        %v493 = vld [vmem:[%s425] sm:$0xf]
        %v494 = vld [vmem:[%s425 + $0x4] sm:$0xf]
        %v495 = vld [vmem:[%s425 + $0x8] sm:$0xf]
        %v496 = vld [vmem:[%s425 + $0xc] sm:$0xf]
        %v497 = vld [vmem:[%s425 + $0x10] sm:$0xf]
        %v498 = vld [vmem:[%s425 + $0x14] sm:$0xf]
        %v499 = vld [vmem:[%s425 + $0x18] sm:$0xf]
        %v500 = vld [vmem:[%s425 + $0x1c] sm:$0xf]
        %v501 = vld [vmem:[%s425 + $0x20] sm:$0xf]
        %v502 = vld [vmem:[%s425 + $0x24] sm:$0xf]
        %v503 = vld [vmem:[%s425 + $0x28] sm:$0xf]
        %v504 = vld [vmem:[%s425 + $0x2c] sm:$0xf]
        %v505 = vld [vmem:[%s425 + $0x30] sm:$0xf]
        %v506 = vld [vmem:[%s425 + $0x34] sm:$0xf]
        %v507 = vld [vmem:[%s425 + $0x38] sm:$0xf]
        %v508 = vld [vmem:[%s425 + $0x3c] sm:$0xf]
        %v509 = vunpack.c.l.bf16 %v493
        %v510 = vunpack.c.l.bf16 %v494
        %v511 = vunpack.c.l.bf16 %v495
        %v512 = vunpack.c.l.bf16 %v496
        %v513 = vunpack.c.l.bf16 %v497
        %v514 = vunpack.c.l.bf16 %v498
        %v515 = vunpack.c.l.bf16 %v499
        %v516 = vunpack.c.l.bf16 %v500
        %v517 = vunpack.c.l.bf16 %v501
        %v518 = vunpack.c.l.bf16 %v502
        %v519 = vunpack.c.l.bf16 %v503
        %v520 = vunpack.c.l.bf16 %v504
        %v521 = vunpack.c.l.bf16 %v505
        %v522 = vunpack.c.l.bf16 %v506
        %v523 = vunpack.c.l.bf16 %v507
        %v524 = vunpack.c.l.bf16 %v508
        %v525 = vtanh.pop %v509
        %v526 = vtanh.pop %v510
        %v527 = vtanh.pop %v511
        %v528 = vtanh.pop %v512
        %v529 = vtanh.pop %v513
        %v530 = vtanh.pop %v514
        %v531 = vtanh.pop %v515
        %v532 = vtanh.pop %v516
        %v533 = vtanh.pop %v517
        %v534 = vtanh.pop %v518
        %v535 = vtanh.pop %v519
        %v536 = vtanh.pop %v520
        %v537 = vtanh.pop %v521
        %v538 = vtanh.pop %v522
        %v539 = vtanh.pop %v523
        %v540 = vtanh.pop %v524
        %v541 = vld [vmem:[%s1] sm:$0xf]
        %v542 = vld [vmem:[%s1 + $0x4] sm:$0xf]
        %v543 = vld [vmem:[%s1 + $0x8] sm:$0xf]
        %v544 = vld [vmem:[%s1 + $0xc] sm:$0xf]
        %v545 = vld [vmem:[%s1 + $0x10] sm:$0xf]
        %v546 = vld [vmem:[%s1 + $0x14] sm:$0xf]
        %v547 = vld [vmem:[%s1 + $0x18] sm:$0xf]
        %v548 = vld [vmem:[%s1 + $0x1c] sm:$0xf]
        %v549 = vld [vmem:[%s1 + $0x20] sm:$0xf]
        %v550 = vld [vmem:[%s1 + $0x24] sm:$0xf]
        %v551 = vld [vmem:[%s1 + $0x28] sm:$0xf]
        %v552 = vld [vmem:[%s1 + $0x2c] sm:$0xf]
        %v553 = vld [vmem:[%s1 + $0x30] sm:$0xf]
        %v554 = vld [vmem:[%s1 + $0x34] sm:$0xf]
        %v555 = vld [vmem:[%s1 + $0x38] sm:$0xf]
        %v556 = vld [vmem:[%s1 + $0x3c] sm:$0xf]
        %v573 = vunpack.c.l.b16 %v541
        %v574 = vunpack.c.l.b16 %v542
        %v575 = vunpack.c.l.b16 %v543
        %v576 = vunpack.c.l.b16 %v544
        %v577 = vunpack.c.l.b16 %v545
        %v578 = vunpack.c.l.b16 %v546
        %v579 = vunpack.c.l.b16 %v547
        %v580 = vunpack.c.l.b16 %v548
        %v581 = vunpack.c.l.b16 %v549
        %v582 = vunpack.c.l.b16 %v550
        %v583 = vunpack.c.l.b16 %v551
        %v584 = vunpack.c.l.b16 %v552
        %v585 = vunpack.c.l.b16 %v553
        %v586 = vunpack.c.l.b16 %v554
        %v587 = vunpack.c.l.b16 %v555
        %v588 = vunpack.c.l.b16 %v556
        %v589 = vpack.c.b16 %v574, %v573
        %v590 = vpack.c.b16 %v576, %v575
        %v591 = vpack.c.b16 %v578, %v577
        %v592 = vpack.c.b16 %v580, %v579
        %v593 = vpack.c.b16 %v582, %v581
        %v594 = vpack.c.b16 %v584, %v583
        %v595 = vpack.c.b16 %v586, %v585
        %v596 = vpack.c.b16 %v588, %v587
        %v621 = vunpack.c.l.b16 %v461
        %v622 = vunpack.c.l.b16 %v462
        %v623 = vunpack.c.l.b16 %v463
        %v624 = vunpack.c.l.b16 %v464
        %v625 = vunpack.c.l.b16 %v465
        %v626 = vunpack.c.l.b16 %v466
        %v627 = vunpack.c.l.b16 %v467
        %v628 = vunpack.c.l.b16 %v468
        %v629 = vunpack.c.l.b16 %v469
        %v630 = vunpack.c.l.b16 %v470
        %v631 = vunpack.c.l.b16 %v471
        %v632 = vunpack.c.l.b16 %v472
        %v633 = vunpack.c.l.b16 %v473
        %v634 = vunpack.c.l.b16 %v474
        %v635 = vunpack.c.l.b16 %v475
        %v636 = vunpack.c.l.b16 %v476
        %v637 = vpack.c.b16 %v622, %v621
        %v638 = vpack.c.b16 %v624, %v623
        %v639 = vpack.c.b16 %v626, %v625
        %v640 = vpack.c.b16 %v628, %v627
        %v641 = vpack.c.b16 %v630, %v629
        %v642 = vpack.c.b16 %v632, %v631
        %v643 = vpack.c.b16 %v634, %v633
        %v644 = vpack.c.b16 %v636, %v635
        %653 = vmatpush.bf16.msra.mxu0 %v644
        %654 = vmatpush.bf16.msra.mxu0 %v643
        %655 = vmatpush.bf16.msra.mxu0 %v642
        %656 = vmatpush.bf16.msra.mxu0 %v641
        %657 = vmatpush.bf16.msra.mxu0 %v640
        %658 = vmatpush.bf16.msra.mxu0 %v639
        %659 = vmatpush.bf16.msra.mxu0 %v638
        %660 = vmatpush.bf16.msra.mxu0 %v637
        %661 = vmatmul.bf16.gmra.mxu0 %v589
        %v662 = vpop.f32.mrf.mxu0
        %v663 = vadd.f32 0.0, %v662
        %v664 = vpop.f32.mrf.mxu0
        %v665 = vadd.f32 0.0, %v664
        %666 = vmatmul.bf16.gmra.mxu0 %v590
        %v667 = vpop.f32.mrf.mxu0
        %v668 = vadd.f32 0.0, %v667
        %v669 = vpop.f32.mrf.mxu0
        %v670 = vadd.f32 0.0, %v669
        %671 = vmatmul.bf16.gmra.mxu0 %v591
        %v672 = vpop.f32.mrf.mxu0
        %v673 = vadd.f32 0.0, %v672
        %v674 = vpop.f32.mrf.mxu0
        %v675 = vadd.f32 0.0, %v674
        %676 = vmatmul.bf16.gmra.mxu0 %v592
        %v677 = vpop.f32.mrf.mxu0
        %v678 = vadd.f32 0.0, %v677
        %v679 = vpop.f32.mrf.mxu0
        %v680 = vadd.f32 0.0, %v679
        %681 = vmatmul.bf16.gmra.mxu0 %v593
        %v682 = vpop.f32.mrf.mxu0
        %v683 = vadd.f32 0.0, %v682
        %v684 = vpop.f32.mrf.mxu0
        %v685 = vadd.f32 0.0, %v684
        %686 = vmatmul.bf16.gmra.mxu0 %v594
        %v687 = vpop.f32.mrf.mxu0
        %v688 = vadd.f32 0.0, %v687
        %v689 = vpop.f32.mrf.mxu0
        %v690 = vadd.f32 0.0, %v689
        %691 = vmatmul.bf16.gmra.mxu0 %v595
        %v692 = vpop.f32.mrf.mxu0
        %v693 = vadd.f32 0.0, %v692
        %v694 = vpop.f32.mrf.mxu0
        %v695 = vadd.f32 0.0, %v694
        %696 = vmatmul.bf16.gmra.mxu0 %v596
        %v697 = vpop.f32.mrf.mxu0
        %v698 = vadd.f32 0.0, %v697
        %v699 = vpop.f32.mrf.mxu0
        %v700 = vadd.f32 0.0, %v699
        %701 = vdwg.mxu0
        %v702 = vld [vmem:[%s0] sm:$0xff]
        %v703 = vld [vmem:[%s0 + $0x8] sm:$0xff]
        %v704 = vld [vmem:[%s0 + $0x10] sm:$0xff]
        %v705 = vld [vmem:[%s0 + $0x18] sm:$0xff]
        %v706 = vld [vmem:[%s0 + $0x20] sm:$0xff]
        %v707 = vld [vmem:[%s0 + $0x28] sm:$0xff]
        %v708 = vld [vmem:[%s0 + $0x30] sm:$0xff]
        %v709 = vld [vmem:[%s0 + $0x38] sm:$0xff]
        %v710 = vld [vmem:[%s0 + $0x40] sm:$0xff]
        %v711 = vld [vmem:[%s0 + $0x48] sm:$0xff]
        %v712 = vld [vmem:[%s0 + $0x50] sm:$0xff]
        %v713 = vld [vmem:[%s0 + $0x58] sm:$0xff]
        %v714 = vld [vmem:[%s0 + $0x60] sm:$0xff]
        %v715 = vld [vmem:[%s0 + $0x68] sm:$0xff]
        %v716 = vld [vmem:[%s0 + $0x70] sm:$0xff]
        %v717 = vld [vmem:[%s0 + $0x78] sm:$0xff]
        %719 = vset.pattern.permute.xlu0 0
        %720 = vperm.xlu0 %719, %v702
        %v721 = vpop.permute.xlu0 %720
        %724 = vset.pattern.permute.xlu0 0
        %725 = vperm.xlu0 %724, %v703
        %v726 = vpop.permute.xlu0 %725
        %729 = vset.pattern.permute.xlu0 0
        %730 = vperm.xlu0 %729, %v704
        %v731 = vpop.permute.xlu0 %730
        %734 = vset.pattern.permute.xlu0 0
        %735 = vperm.xlu0 %734, %v705
        %v736 = vpop.permute.xlu0 %735
        %739 = vset.pattern.permute.xlu0 0
        %740 = vperm.xlu0 %739, %v706
        %v741 = vpop.permute.xlu0 %740
        %744 = vset.pattern.permute.xlu0 0
        %745 = vperm.xlu0 %744, %v707
        %v746 = vpop.permute.xlu0 %745
        %749 = vset.pattern.permute.xlu0 0
        %750 = vperm.xlu0 %749, %v708
        %v751 = vpop.permute.xlu0 %750
        %754 = vset.pattern.permute.xlu0 0
        %755 = vperm.xlu0 %754, %v709
        %v756 = vpop.permute.xlu0 %755
        %759 = vset.pattern.permute.xlu0 0
        %760 = vperm.xlu0 %759, %v710
        %v761 = vpop.permute.xlu0 %760
        %764 = vset.pattern.permute.xlu0 0
        %765 = vperm.xlu0 %764, %v711
        %v766 = vpop.permute.xlu0 %765
        %769 = vset.pattern.permute.xlu0 0
        %770 = vperm.xlu0 %769, %v712
        %v771 = vpop.permute.xlu0 %770
        %774 = vset.pattern.permute.xlu0 0
        %775 = vperm.xlu0 %774, %v713
        %v776 = vpop.permute.xlu0 %775
        %779 = vset.pattern.permute.xlu0 0
        %780 = vperm.xlu0 %779, %v714
        %v781 = vpop.permute.xlu0 %780
        %784 = vset.pattern.permute.xlu0 0
        %785 = vperm.xlu0 %784, %v715
        %v786 = vpop.permute.xlu0 %785
        %789 = vset.pattern.permute.xlu0 0
        %790 = vperm.xlu0 %789, %v716
        %v791 = vpop.permute.xlu0 %790
        %794 = vset.pattern.permute.xlu0 0
        %795 = vperm.xlu0 %794, %v717
        %v796 = vpop.permute.xlu0 %795
        %v798 = vmul.f32 %v721, %v477
        %v799 = vmul.f32 %v726, %v478
        %v800 = vmul.f32 %v731, %v479
        %v801 = vmul.f32 %v736, %v480
        %v802 = vmul.f32 %v741, %v481
        %v803 = vmul.f32 %v746, %v482
        %v804 = vmul.f32 %v751, %v483
        %v805 = vmul.f32 %v756, %v484
        %v806 = vmul.f32 %v761, %v485
        %v807 = vmul.f32 %v766, %v486
        %v808 = vmul.f32 %v771, %v487
        %v809 = vmul.f32 %v776, %v488
        %v810 = vmul.f32 %v781, %v489
        %v811 = vmul.f32 %v786, %v490
        %v812 = vmul.f32 %v791, %v491
        %v813 = vmul.f32 %v796, %v492
        %v814 = vmul.f32 %v663, %v525
        %v815 = vmul.f32 %v665, %v526
        %v816 = vmul.f32 %v668, %v527
        %v817 = vmul.f32 %v670, %v528
        %v818 = vmul.f32 %v673, %v529
        %v819 = vmul.f32 %v675, %v530
        %v820 = vmul.f32 %v678, %v531
        %v821 = vmul.f32 %v680, %v532
        %v822 = vmul.f32 %v683, %v533
        %v823 = vmul.f32 %v685, %v534
        %v824 = vmul.f32 %v688, %v535
        %v825 = vmul.f32 %v690, %v536
        %v826 = vmul.f32 %v693, %v537
        %v827 = vmul.f32 %v695, %v538
        %v828 = vmul.f32 %v698, %v539
        %v829 = vmul.f32 %v700, %v540
        %v830 = vsub.f32 %v798, %v814
        %v831 = vsub.f32 %v799, %v815
        %v832 = vsub.f32 %v800, %v816
        %v833 = vsub.f32 %v801, %v817
        %v834 = vsub.f32 %v802, %v818
        %v835 = vsub.f32 %v803, %v819
        %v836 = vsub.f32 %v804, %v820
        %v837 = vsub.f32 %v805, %v821
        %v838 = vsub.f32 %v806, %v822
        %v839 = vsub.f32 %v807, %v823
        %v840 = vsub.f32 %v808, %v824
        %v841 = vsub.f32 %v809, %v825
        %v842 = vsub.f32 %v810, %v826
        %v843 = vsub.f32 %v811, %v827
        %v844 = vsub.f32 %v812, %v828
        %v845 = vsub.f32 %v813, %v829
        %v846 = vadd.f32 %v830, %v831
        %v847 = vadd.f32 %v846, %v832
        %v848 = vadd.f32 %v847, %v833
        %v849 = vadd.f32 %v848, %v834
        %v850 = vadd.f32 %v849, %v835
        %v851 = vadd.f32 %v850, %v836
        %v852 = vadd.f32 %v851, %v837
        %v853 = vadd.f32 %v852, %v838
        %v854 = vadd.f32 %v853, %v839
        %v855 = vadd.f32 %v854, %v840
        %v856 = vadd.f32 %v855, %v841
        %v857 = vadd.f32 %v856, %v842
        %v858 = vadd.f32 %v857, %v843
        %v859 = vadd.f32 %v858, %v844
        %v860 = vadd.f32 %v859, %v845
        %v861 = vrot.slane %v860, 4
        %v862 = vadd.f32 %v860, %v861
        %v863 = vrot.slane %v862, 2
        %v864 = vadd.f32 %v862, %v863
        %v865 = vrot.slane %v864, 1
        %v866 = vadd.f32 %v864, %v865
        %v867 = vld [vmem:[%s457] sm:$0x1]
        %v868 = vadd.f32 %v866, %v867
        %869 = vst [vmem:[%s460] sm:$0x1] %v868
        %p870 = scmp.lt.s32.totalorder %s16, 1
        %s871 = scalar_select %p870, %s16, 1
        %s872 = scalar_lea.vmem %s5, %s871
        // Predicated region
        $region123: #{q_i_j_forward_doc.1} parent=113 // pred_check
          %p873 = pneg %p154
        $region124: #{q_i_j_forward_doc.1} parent=113 // pred_check_branch
          %875 = sbr.rel (%p873) target = $region126
        $region125: #{q_i_j_forward_doc.1} parent=113 // pred_region
          _
        $region126: #{q_i_j_forward_doc.1} parent=113 // pred_fallthru
          _
      $region114: #{q_i_j_forward_doc.1} parent=5 // pred_fallthru
        _
      %p876 = scmp.le.s32.totalorder 2, %s11
      // Predicated region
      $region127: #{q_i_j_forward_doc.1} parent=5 // pred_check
        %p877 = pneg %p876
      $region128: #{q_i_j_forward_doc.1} parent=5 // pred_check_branch
        %879 = sbr.rel (%p877) target = $region130
      $region129: #{q_i_j_forward_doc.1} parent=5 // pred_region
        %s880 = ssub.s32 %s11, 2
        // Predicated region
        $region131: #{q_i_j_forward_doc.1} parent=129 // pred_check
          %p881 = pneg %p160
        $region132: #{q_i_j_forward_doc.1} parent=129 // pred_check_branch
          %883 = sbr.rel (%p881) target = $region134
        $region133: #{q_i_j_forward_doc.1} parent=129 // pred_region
          %p884 = scmp.lt.s32.totalorder %s17, 1
          %s885 = scalar_select %p884, %s17, 1
          %s886 = scalar_lea.vmem %s5, %s885
        $region134: #{q_i_j_forward_doc.1} parent=129 // pred_fallthru
          _
      $region130: #{q_i_j_forward_doc.1} parent=5 // pred_fallthru
        _
    $region6: #{q_i_j_forward_doc.1} parent=1 // loop_footer
      %s15 = sadd.s32 1, %s11
    $region7: #{q_i_j_forward_doc.1} parent=1 // loop_footer_branch
      %10 = sbr.rel target = $region3
    $region8: #{q_i_j_forward_doc.1} parent=1 // loop_exit
      _

</llo_original>
